<compile_context>
chip_gen: v7x
topology: tpu7x:2x2x1
jax: 0.10.0
libtpu: 0.0.40
codegen_flags: <defaults>
</compile_context>

<pallas_src>
import functools

import numpy as np
import jax
import jax.numpy as jnp
from jax.experimental import pallas as pl
from jax.experimental.pallas import tpu as pltpu

_H1, _H2 = 128, 64                 # hidden sizes fixed by the module
_SUBLANE = 8                       # f32 sublane granularity
_VMEM_BUDGET = 24 * 1024 * 1024    # conservative tile budget (fits all generations)
_VMEM_LIMIT = 32 * 1024 * 1024     # explicit scoped-VMEM request (<= physical on v7x)


def _round_up(n, m):
    return ((n + m - 1) // m) * m


def _mlp_kernel(x_ref, w1_ref, b1_ref, w2_ref, b2_ref, w3_ref, b3_ref, o_ref):
    """Fused Linear->ReLU->Linear->ReLU->Linear on one (tile_b, tile_n) tile.

    Weights may be bf16 (MXU-native); the x tile is cast in-kernel (no extra
    HBM traffic) and every matmul accumulates in f32. Biases stay f32.
    """
    cd = w1_ref.dtype
    x = x_ref[...].astype(cd)

    h1 = jnp.dot(x, w1_ref[...], preferred_element_type=jnp.float32) + b1_ref[...]
    h1 = jnp.maximum(h1, 0.0)

    h2 = jnp.dot(h1.astype(cd), w2_ref[...],
                 preferred_element_type=jnp.float32) + b2_ref[...]
    h2 = jnp.maximum(h2, 0.0)

    h3 = jnp.dot(h2.astype(cd), w3_ref[...],
                 preferred_element_type=jnp.float32) + b3_ref[...]
    o_ref[...] = h3.astype(o_ref.dtype)


def _choose_tiles(B, input_dim, out_dim, w_bytes):
    """Pick (tile_b, tile_n) from a VMEM byte budget + a core-count heuristic."""
    # Column tiling only matters for very wide output layers. Small out_dim:
    # one full-width tile (last BlockSpec dim == full array dim is always legal).
    tile_n = out_dim if out_dim <= 512 else 256   # 256 = MXU/lane friendly

    # VMEM accounting (bytes): double-buffered x/out tiles + live f32
    # activations; weights counted x2 for headroom even though the invariant
    # ones are single-buffered.
    weight_vmem = 2 * (
        (input_dim * _H1 + _H1 * _H2 + _H2 * tile_n) * w_bytes
        + (_H1 + _H2 + tile_n) * 4
    )
    row_bytes = 2 * input_dim * 4 + 2 * tile_n * 4 + (_H1 + _H2 + tile_n) * 4
    cap = max(_SUBLANE,
              ((_VMEM_BUDGET - weight_vmem) // row_bytes) // _SUBLANE * _SUBLANE)

    if B <= _SUBLANE:
        # Tiny batch: block dims equal the full array dims (always legal).
        return B, tile_n

    floor_b = (B // _SUBLANE) * _SUBLANE
    if B >= 256:
        # >= 2 grid steps so v7x's two TensorCores both get a "parallel" slice;
        # costs ~0.35us of extra step overhead on v5e/v6e (1 TC) -- negligible.
        target = _round_up((B + 1) // 2, _SUBLANE)
    else:
        # Small batch: one fat tile; grid steps are a sequential loop on 1-TC chips.
        target = floor_b
    tile_b = max(_SUBLANE, min(target, floor_b, cap, 2048))
    return tile_b, tile_n


@functools.partial(jax.jit, static_argnames=("tile_b", "compute_dtype"))
def enrollment_forward(x, params, *, tile_b=None, compute_dtype=jnp.float32):
    """x: (B, input_dim) float32. params: dict of w1,b1,w2,b2,w3,b3."""
    B, input_dim = x.shape
    cd = np.dtype(compute_dtype)
    w1, b1 = params["w1"].astype(cd), params["b1"]   # (input_dim,128), (1,128)
    w2, b2 = params["w2"].astype(cd), params["b2"]   # (128,64),        (1,64)
    w3, b3 = params["w3"].astype(cd), params["b3"]   # (64,out_dim),    (1,out_dim)
    out_dim = w3.shape[1]

    auto_tb, tile_n = _choose_tiles(B, input_dim, out_dim, cd.itemsize)
    if tile_b is None:
        tile_b = auto_tb
    else:
        tile_b = max(1, min(tile_b, B))
        if B > _SUBLANE:
            tile_b = max(_SUBLANE, (tile_b // _SUBLANE) * _SUBLANE)

    grid_b = pl.cdiv(B, tile_b)
    grid_n = pl.cdiv(out_dim, tile_n)

    def _wspec(shape, index_map, invariant):
        # Grid-invariant weight/bias blocks: DMA'd once and kept resident.
        # Single-buffer them so no VMEM is spent on a second copy.
        if invariant:
            try:
                return pl.BlockSpec(shape, index_map, pipeline_mode=pl.Buffered(1))
            except TypeError:  # BlockSpec without pipeline_mode support
                pass
        return pl.BlockSpec(shape, index_map)

    const = lambda i, j: (0, 0)
    in_specs = [
        pl.BlockSpec((tile_b, input_dim), lambda i, j: (i, 0)),          # x
        _wspec(w1.shape, const, True), _wspec(b1.shape, const, True),    # layer1
        _wspec(w2.shape, const, True), _wspec(b2.shape, const, True),    # layer2
        _wspec((_H2, tile_n), lambda i, j: (0, j), grid_n == 1),         # w3
        _wspec((1, tile_n), lambda i, j: (0, j), grid_n == 1),           # b3
    ]
    out_spec = pl.BlockSpec((tile_b, tile_n), lambda i, j: (i, j))

    flops = 2 * B * (input_dim * _H1 + _H1 * _H2 + _H2 * out_dim)
    bytes_accessed = (
        4 * B * (input_dim + out_dim)
        + cd.itemsize * (input_dim * _H1 + _H1 * _H2 + _H2 * out_dim)
        + 4 * (_H1 + _H2 + out_dim)
    )

    return pl.pallas_call(
        _mlp_kernel,
        out_shape=jax.ShapeDtypeStruct((B, out_dim), jnp.float32),
        grid_spec=pl.GridSpec(
            grid=(grid_b, grid_n),
            in_specs=in_specs,
            out_specs=out_spec,
        ),
        compiler_params=pltpu.CompilerParams(
            dimension_semantics=("parallel", "parallel"),
            vmem_limit_bytes=_VMEM_LIMIT,
        ),
        cost_estimate=pl.CostEstimate(
            flops=flops, transcendentals=0, bytes_accessed=bytes_accessed
        ),
    )(x, w1, b1, w2, b2, w3, b3)


def init_params(key, input_dim, output_dim):
    """Deterministic init mirroring nn.Linear's U(-1/sqrt(fan_in), 1/sqrt(fan_in))."""
    dims = [(input_dim, _H1), (_H1, _H2), (_H2, output_dim)]
    params = {}
    for idx, (fan_in, fan_out) in enumerate(dims, start=1):
        key, kw, kb = jax.random.split(key, 3)
        bound = 1.0 / jnp.sqrt(fan_in)
        params[f"w{idx}"] = jax.random.uniform(
            kw, (fan_in, fan_out), jnp.float32, -bound, bound
        )
        params[f"b{idx}"] = jax.random.uniform(
            kb, (1, fan_out), jnp.float32, -bound, bound
        )
    return params


def _reference(x, params):
    h = jnp.maximum(x @ params["w1"] + params["b1"], 0.0)
    h = jnp.maximum(h @ params["w2"] + params["b2"], 0.0)
    return h @ params["w3"] + params["b3"]


if __name__ == "__main__":
    key = jax.random.PRNGKey(0)
    input_dim, output_dim = 32, 16

    key, kp = jax.random.split(key)
    params = init_params(kp, input_dim, output_dim)

    # Small, aligned batch.
    key, kx = jax.random.split(key)
    x = jax.random.normal(kx, (8, input_dim), jnp.float32)
    out = jax.block_until_ready(enrollment_forward(x, params))
    ref = _reference(x, params)
    assert out.shape == (8, output_dim)
    assert jnp.allclose(out, ref, atol=1e-5, rtol=1e-5)

    # Ragged batch (partial last tile handled in-kernel; no wrapper-side padding).
    key, kx2 = jax.random.split(key)
    x2 = jax.random.normal(kx2, (10, input_dim), jnp.float32)
    out2 = jax.block_until_ready(enrollment_forward(x2, params))
    assert out2.shape == (10, output_dim)
    assert jnp.allclose(out2, _reference(x2, params), atol=1e-5, rtol=1e-5)

    # Tiny batch (block dims == full array dims).
    x3 = jax.random.normal(jax.random.PRNGKey(3), (2, input_dim), jnp.float32)
    out3 = jax.block_until_ready(enrollment_forward(x3, params))
    assert out3.shape == (2, output_dim)
    assert jnp.allclose(out3, _reference(x3, params), atol=1e-5, rtol=1e-5)

    # bf16 MXU path (f32 accumulation) -- numerics relaxed accordingly.
    out_bf16 = jax.block_until_ready(
        enrollment_forward(x, params, compute_dtype=jnp.bfloat16)
    )
    assert jnp.allclose(out_bf16, ref, atol=5e-2, rtol=5e-2)

    print("KERNEL_OK")
</pallas_src>

<mosaic_0001>
module attributes {stable_mosaic.version = 11 : i64} {
  func.func @_mlp_kernel(%arg0: i32, %arg1: i32, %arg2: memref<8x32xf32, #tpu.memory_space<vmem>>, %arg3: memref<32x128xf32, #tpu.memory_space<vmem>>, %arg4: memref<1x128xf32, #tpu.memory_space<vmem>>, %arg5: memref<128x64xf32, #tpu.memory_space<vmem>>, %arg6: memref<1x64xf32, #tpu.memory_space<vmem>>, %arg7: memref<64x16xf32, #tpu.memory_space<vmem>>, %arg8: memref<1x16xf32, #tpu.memory_space<vmem>>, %arg9: memref<8x16xf32, #tpu.memory_space<vmem>>) attributes {dimension_semantics = [#tpu.dimension_semantics<parallel>, #tpu.dimension_semantics<parallel>], iteration_bounds = array<i64: 1, 1>, scalar_prefetch = 0 : i64, scratch_operands = 0 : i64, tpu.core_type = #tpu.core_type<tc>, window_params = [{transform_indices = @transform_0, window_bounds = array<i64: 8, 32>}, {pipeline_mode = #tpu.pipeline_mode<synchronous>, transform_indices = @transform_1, window_bounds = array<i64: 32, 128>}, {pipeline_mode = #tpu.pipeline_mode<synchronous>, transform_indices = @transform_2, window_bounds = array<i64: 1, 128>}, {pipeline_mode = #tpu.pipeline_mode<synchronous>, transform_indices = @transform_3, window_bounds = array<i64: 128, 64>}, {pipeline_mode = #tpu.pipeline_mode<synchronous>, transform_indices = @transform_4, window_bounds = array<i64: 1, 64>}, {pipeline_mode = #tpu.pipeline_mode<synchronous>, transform_indices = @transform_5, window_bounds = array<i64: 64, 16>}, {pipeline_mode = #tpu.pipeline_mode<synchronous>, transform_indices = @transform_6, window_bounds = array<i64: 1, 16>}, {transform_indices = @transform_7, window_bounds = array<i64: 8, 16>}]} {
    %c0 = arith.constant 0 : index
    %c0_0 = arith.constant 0 : index
    %0 = vector.load %arg2[%c0, %c0_0] : memref<8x32xf32, #tpu.memory_space<vmem>>, vector<8x32xf32>
    %c0_1 = arith.constant 0 : index
    %c0_2 = arith.constant 0 : index
    %1 = vector.load %arg3[%c0_1, %c0_2] : memref<32x128xf32, #tpu.memory_space<vmem>>, vector<32x128xf32>
    %cst = arith.constant dense<0.000000e+00> : vector<8x128xf32>
    %2 = tpu.matmul %0, %1, %cst {dimension_numbers = #tpu.dot_dimension_numbers<[1], [0], [0], [1], [0, 0, 1, 1], [], []>} : vector<8x32xf32>, vector<32x128xf32>, vector<8x128xf32> -> vector<8x128xf32>
    %c0_3 = arith.constant 0 : index
    %c0_4 = arith.constant 0 : index
    %3 = vector.load %arg4[%c0_3, %c0_4] : memref<1x128xf32, #tpu.memory_space<vmem>>, vector<1x128xf32>
    %4 = vector.broadcast %3 : vector<1x128xf32> to vector<8x128xf32>
    %5 = arith.addf %2, %4 : vector<8x128xf32>
    %cst_5 = arith.constant 0.000000e+00 : f32
    %6 = vector.broadcast %cst_5 : f32 to vector<8x128xf32>
    %7 = arith.maximumf %5, %6 : vector<8x128xf32>
    %c0_6 = arith.constant 0 : index
    %c0_7 = arith.constant 0 : index
    %8 = vector.load %arg5[%c0_6, %c0_7] : memref<128x64xf32, #tpu.memory_space<vmem>>, vector<128x64xf32>
    %cst_8 = arith.constant dense<0.000000e+00> : vector<8x64xf32>
    %9 = tpu.matmul %7, %8, %cst_8 {dimension_numbers = #tpu.dot_dimension_numbers<[1], [0], [0], [1], [0, 0, 1, 1], [], []>} : vector<8x128xf32>, vector<128x64xf32>, vector<8x64xf32> -> vector<8x64xf32>
    %c0_9 = arith.constant 0 : index
    %c0_10 = arith.constant 0 : index
    %10 = vector.load %arg6[%c0_9, %c0_10] : memref<1x64xf32, #tpu.memory_space<vmem>>, vector<1x64xf32>
    %11 = vector.broadcast %10 : vector<1x64xf32> to vector<8x64xf32>
    %12 = arith.addf %9, %11 : vector<8x64xf32>
    %cst_11 = arith.constant 0.000000e+00 : f32
    %13 = vector.broadcast %cst_11 : f32 to vector<8x64xf32>
    %14 = arith.maximumf %12, %13 : vector<8x64xf32>
    %c0_12 = arith.constant 0 : index
    %c0_13 = arith.constant 0 : index
    %15 = vector.load %arg7[%c0_12, %c0_13] : memref<64x16xf32, #tpu.memory_space<vmem>>, vector<64x16xf32>
    %cst_14 = arith.constant dense<0.000000e+00> : vector<8x16xf32>
    %16 = tpu.matmul %14, %15, %cst_14 {dimension_numbers = #tpu.dot_dimension_numbers<[1], [0], [0], [1], [0, 0, 1, 1], [], []>} : vector<8x64xf32>, vector<64x16xf32>, vector<8x16xf32> -> vector<8x16xf32>
    %c0_15 = arith.constant 0 : index
    %c0_16 = arith.constant 0 : index
    %17 = vector.load %arg8[%c0_15, %c0_16] : memref<1x16xf32, #tpu.memory_space<vmem>>, vector<1x16xf32>
    %18 = vector.broadcast %17 : vector<1x16xf32> to vector<8x16xf32>
    %19 = arith.addf %16, %18 : vector<8x16xf32>
    %c0_17 = arith.constant 0 : index
    %c0_18 = arith.constant 0 : index
    %20 = vector.load %arg9[%c0_17, %c0_18] : memref<8x16xf32, #tpu.memory_space<vmem>>, vector<8x16xf32>
    tpu.vector_store %arg9[%c0_17, %c0_18], %19 {strides = array<i32>} : memref<8x16xf32, #tpu.memory_space<vmem>>, vector<8x16xf32>,
    return
  }
  func.func @transform_0(%arg0: i32, %arg1: i32) -> (i32, i32) {
    %c0_i32 = arith.constant 0 : i32
    %c0_i32_0 = arith.constant 0 : i32
    return %arg0, %c0_i32 : i32, i32
  }
  func.func @transform_1(%arg0: i32, %arg1: i32) -> (i32, i32) {
    %c0_i32 = arith.constant 0 : i32
    %c0_i32_0 = arith.constant 0 : i32
    %c0_i32_1 = arith.constant 0 : i32
    return %c0_i32, %c0_i32_0 : i32, i32
  }
  func.func @transform_2(%arg0: i32, %arg1: i32) -> (i32, i32) {
    %c0_i32 = arith.constant 0 : i32
    %c0_i32_0 = arith.constant 0 : i32
    %c0_i32_1 = arith.constant 0 : i32
    return %c0_i32, %c0_i32_0 : i32, i32
  }
  func.func @transform_3(%arg0: i32, %arg1: i32) -> (i32, i32) {
    %c0_i32 = arith.constant 0 : i32
    %c0_i32_0 = arith.constant 0 : i32
    %c0_i32_1 = arith.constant 0 : i32
    return %c0_i32, %c0_i32_0 : i32, i32
  }
  func.func @transform_4(%arg0: i32, %arg1: i32) -> (i32, i32) {
    %c0_i32 = arith.constant 0 : i32
    %c0_i32_0 = arith.constant 0 : i32
    %c0_i32_1 = arith.constant 0 : i32
    return %c0_i32, %c0_i32_0 : i32, i32
  }
  func.func @transform_5(%arg0: i32, %arg1: i32) -> (i32, i32) {
    %c0_i32 = arith.constant 0 : i32
    %c0_i32_0 = arith.constant 0 : i32
    return %c0_i32, %arg1 : i32, i32
  }
  func.func @transform_6(%arg0: i32, %arg1: i32) -> (i32, i32) {
    %c0_i32 = arith.constant 0 : i32
    %c0_i32_0 = arith.constant 0 : i32
    return %c0_i32, %arg1 : i32, i32
  }
  func.func @transform_7(%arg0: i32, %arg1: i32) -> (i32, i32) {
    %c0_i32 = arith.constant 0 : i32
    return %arg0, %arg1 : i32, i32
  }
}

</mosaic_0001>

<llo_original>
// kernel: enrollment_forward.1
$region0: #{enrollment_forward.1}
  #allocation0 [shape = 'u32[]', space=smem, size = 0x4, offset = 0x4, fixed_abs, tag = 'smem constant byte address 0x4 - core index']
  #allocation1 [shape = 'u32[144,128]{1,0:T(1,128)}', space=vmem, size = 0x12000, scoped, tag = 'internal scratch']
  %s0 = inlined_call_operand.vmem [shape: f32[8,32], index: 0, kind: input, shape index: {}]
  %s1 = inlined_call_operand.vmem [shape: f32[32,128], index: 1, kind: input, shape index: {}]
  %s2 = inlined_call_operand.vmem [shape: f32[1,128], index: 2, kind: input, shape index: {}]
  %s3 = inlined_call_operand.vmem [shape: f32[128,64], index: 3, kind: input, shape index: {}]
  %s4 = inlined_call_operand.vmem [shape: f32[1,64], index: 4, kind: input, shape index: {}]
  %s5 = inlined_call_operand.vmem [shape: f32[64,16], index: 5, kind: input, shape index: {}]
  %s6 = inlined_call_operand.vmem [shape: f32[1,16], index: 6, kind: input, shape index: {}]
  %s7 = inlined_call_operand.hbm [shape: f32[8,16], index: 7, kind: output, shape index: {}]
  %s8 = sld [smem:[#allocation0]]
  $region38: #{enrollment_forward.1} parent=0
    _
  %s10 = ssub.s32 1, %s8
  %s11 = scalar_select 0, %s10, %s8
  $region1: #{enrollment_forward.1} parent=0
    #allocation2 [shape = 'u8[4096]{0}', space=vmem, size = 0x1000, scoped, tag = 'output window, operand 0, single buffered']
    #allocation3 [shape = 's32[1]{0}', space=sflag, size = 0x4, scoped, tag = 'scoped memory for enrollment_forward.1']
    %12 = vsyncpa [#allocation3], 0
    // Predicated region
    $region2: #{enrollment_forward.1} parent=1 // pred_check
      _
    $region3: #{enrollment_forward.1} parent=1 // pred_check_branch
      %14 = sbr.rel (0) target = $region5
    $region4: #{enrollment_forward.1} parent=1 // pred_region
      _
    $region5: #{enrollment_forward.1} parent=1 // pred_fallthru
      _
    // Predicated region
    $region6: #{enrollment_forward.1} parent=1 // pred_check
      _
    $region7: #{enrollment_forward.1} parent=1 // pred_check_branch
      %16 = sbr.rel (0) target = $region9
    $region8: #{enrollment_forward.1} parent=1 // pred_region
      _
    $region9: #{enrollment_forward.1} parent=1 // pred_fallthru
      _
    // Predicated region
    $region10: #{enrollment_forward.1} parent=1 // pred_check
      _
    $region11: #{enrollment_forward.1} parent=1 // pred_check_branch
      %18 = sbr.rel (0) target = $region13
    $region12: #{enrollment_forward.1} parent=1 // pred_region
      _
    $region13: #{enrollment_forward.1} parent=1 // pred_fallthru
      _
    // Predicated region
    $region14: #{enrollment_forward.1} parent=1 // pred_check
      _
    $region15: #{enrollment_forward.1} parent=1 // pred_check_branch
      %20 = sbr.rel (0) target = $region17
    $region16: #{enrollment_forward.1} parent=1 // pred_region
      _
    $region17: #{enrollment_forward.1} parent=1 // pred_fallthru
      _
    // Predicated region
    $region18: #{enrollment_forward.1} parent=1 // pred_check
      _
    $region19: #{enrollment_forward.1} parent=1 // pred_check_branch
      %22 = sbr.rel (0) target = $region21
    $region20: #{enrollment_forward.1} parent=1 // pred_region
      _
    $region21: #{enrollment_forward.1} parent=1 // pred_fallthru
      _
    // Predicated region
    $region22: #{enrollment_forward.1} parent=1 // pred_check
      _
    $region23: #{enrollment_forward.1} parent=1 // pred_check_branch
      %24 = sbr.rel (0) target = $region25
    $region24: #{enrollment_forward.1} parent=1 // pred_region
      _
    $region25: #{enrollment_forward.1} parent=1 // pred_fallthru
      _
    // Predicated region
    $region26: #{enrollment_forward.1} parent=1 // pred_check
      _
    $region27: #{enrollment_forward.1} parent=1 // pred_check_branch
      %26 = sbr.rel (0) target = $region29
    $region28: #{enrollment_forward.1} parent=1 // pred_region
      _
    $region29: #{enrollment_forward.1} parent=1 // pred_fallthru
      _
    %v27 = vld [vmem:[%s0] sm:$0xff]
    %v28 = vld [vmem:[%s1] sm:$0xff]
    %v29 = vld [vmem:[%s1 + $0x8] sm:$0xff]
    %v30 = vld [vmem:[%s1 + $0x10] sm:$0xff]
    %v31 = vld [vmem:[%s1 + $0x18] sm:$0xff]
    %v32 = vld [vmem:[%s2] sm:$0x1]
    %v34 = vlaneseq
    %v35 = vshrl.u32 %v34, 7
    %v36 = vsub.s32 0, %v35
    %v37 = vrot.slane %v32, %v36
    %vm39 = vcmask 261120
    %v41 = vsel %vm39, %v27, 0
    %43 = vmatprep.subr.mxu0 0.0
    %44 = vmatpush1.msra.mxu0 %v28
    %45 = vmatprep.subr.mxu0 0.0
    %46 = vmatpush1.msra.mxu0 %v29
    %47 = vmatprep.subr.mxu0 0.0
    %48 = vmatpush1.msra.mxu0 %v30
    %49 = vmatprep.subr.mxu0 0.0
    %50 = vmatpush1.msra.mxu0 %v31
    %51 = vmatprep.subr.mxu0 0.0
    %52 = vmatpush1.msra.mxu0 0.0
    %53 = vmatprep.subr.mxu0 0.0
    %54 = vmatpush1.msra.mxu0 0.0
    %55 = vmatprep.subr.mxu0 0.0
    %56 = vmatpush1.msra.mxu0 0.0
    %57 = vmatprep.subr.mxu0 0.0
    %58 = vmatpush1.msra.mxu0 0.0
    %59 = vmatprep.subr.mxu0 0.0
    %60 = vmatpush1.msra.mxu0 0.0
    %61 = vmatprep.subr.mxu0 0.0
    %62 = vmatpush1.msra.mxu0 0.0
    %63 = vmatprep.subr.mxu0 0.0
    %64 = vmatpush1.msra.mxu0 0.0
    %65 = vmatprep.subr.mxu0 0.0
    %66 = vmatpush1.msra.mxu0 0.0
    %67 = vmatprep.subr.mxu0 0.0
    %68 = vmatpush1.msra.mxu0 0.0
    %69 = vmatprep.subr.mxu0 0.0
    %70 = vmatpush1.msra.mxu0 0.0
    %71 = vmatprep.subr.mxu0 0.0
    %72 = vmatpush1.msra.mxu0 0.0
    %73 = vmatprep.subr.mxu0 0.0
    %74 = vmatpush1.msra.mxu0 0.0
    %75 = vmatprep.subr.mxu0 0.0
    %76 = vmatpush1.msra.mxu0 0.0
    %77 = vmatprep.subr.mxu0 0.0
    %78 = vmatpush1.msra.mxu0 0.0
    %79 = vmatprep.subr.mxu0 0.0
    %80 = vmatpush1.msra.mxu0 0.0
    %81 = vmatprep.subr.mxu0 0.0
    %82 = vmatpush1.msra.mxu0 0.0
    %83 = vmatprep.subr.mxu0 0.0
    %84 = vmatpush1.msra.mxu0 0.0
    %85 = vmatprep.subr.mxu0 0.0
    %86 = vmatpush1.msra.mxu0 0.0
    %87 = vmatprep.subr.mxu0 0.0
    %88 = vmatpush1.msra.mxu0 0.0
    %89 = vmatprep.subr.mxu0 0.0
    %90 = vmatpush1.msra.mxu0 0.0
    %91 = vmatprep.subr.mxu0 0.0
    %92 = vmatpush1.msra.mxu0 0.0
    %93 = vmatprep.subr.mxu0 0.0
    %94 = vmatpush1.msra.mxu0 0.0
    %95 = vmatprep.subr.mxu0 0.0
    %96 = vmatpush1.msra.mxu0 0.0
    %97 = vmatprep.subr.mxu0 0.0
    %98 = vmatpush1.msra.mxu0 0.0
    %99 = vmatprep.subr.mxu0 0.0
    %100 = vmatpush1.msra.mxu0 0.0
    %101 = vmatprep.subr.mxu0 0.0
    %102 = vmatpush1.msra.mxu0 0.0
    %103 = vmatprep.subr.mxu0 0.0
    %104 = vmatpush1.msra.mxu0 0.0
    %105 = vmatprep.subr.mxu0 0.0
    %106 = vmatpush1.msra.mxu0 0.0
    %107 = vmatprep.mubr.f32.mxu0 0.0
    %108 = vmatmul.mubr.f32.gmra.mrb[0].mxu0 %v41
    %v109 = vpop.f32.mrb[0].mxu0
    %v110 = vadd.f32 %v37, %v109
    %v111 = vpop.f32.mrb[0].mxu0
    %112 = vdwg.mxu0
    %v113 = vmax.f32 %v110, 0.0
    %v114 = vld [vmem:[%s3] sm:$0xff]
    %v115 = vld [vmem:[%s3 + $0x8] sm:$0xff]
    %v116 = vld [vmem:[%s3 + $0x10] sm:$0xff]
    %v117 = vld [vmem:[%s3 + $0x18] sm:$0xff]
    %v118 = vld [vmem:[%s3 + $0x20] sm:$0xff]
    %v119 = vld [vmem:[%s3 + $0x28] sm:$0xff]
    %v120 = vld [vmem:[%s3 + $0x30] sm:$0xff]
    %v121 = vld [vmem:[%s3 + $0x38] sm:$0xff]
    %v122 = vld [vmem:[%s3 + $0x40] sm:$0xff]
    %v123 = vld [vmem:[%s3 + $0x48] sm:$0xff]
    %v124 = vld [vmem:[%s3 + $0x50] sm:$0xff]
    %v125 = vld [vmem:[%s3 + $0x58] sm:$0xff]
    %v126 = vld [vmem:[%s3 + $0x60] sm:$0xff]
    %v127 = vld [vmem:[%s3 + $0x68] sm:$0xff]
    %v128 = vld [vmem:[%s3 + $0x70] sm:$0xff]
    %v129 = vld [vmem:[%s3 + $0x78] sm:$0xff]
    %v130 = vld [vmem:[%s4] sm:$0x1]
    %v132 = vlaneseq
    %v133 = vshrl.u32 %v132, 7
    %v134 = vsub.s32 0, %v133
    %v135 = vrot.slane %v130, %v134
    %137 = vmatprep.subr.mxu0 0.0
    %138 = vmatpush1.msra.mxu0 %v114
    %139 = vmatprep.subr.mxu0 0.0
    %140 = vmatpush1.msra.mxu0 %v115
    %141 = vmatprep.subr.mxu0 0.0
    %142 = vmatpush1.msra.mxu0 %v116
    %143 = vmatprep.subr.mxu0 0.0
    %144 = vmatpush1.msra.mxu0 %v117
    %145 = vmatprep.subr.mxu0 0.0
    %146 = vmatpush1.msra.mxu0 %v118
    %147 = vmatprep.subr.mxu0 0.0
    %148 = vmatpush1.msra.mxu0 %v119
    %149 = vmatprep.subr.mxu0 0.0
    %150 = vmatpush1.msra.mxu0 %v120
    %151 = vmatprep.subr.mxu0 0.0
    %152 = vmatpush1.msra.mxu0 %v121
    %153 = vmatprep.subr.mxu0 0.0
    %154 = vmatpush1.msra.mxu0 %v122
    %155 = vmatprep.subr.mxu0 0.0
    %156 = vmatpush1.msra.mxu0 %v123
    %157 = vmatprep.subr.mxu0 0.0
    %158 = vmatpush1.msra.mxu0 %v124
    %159 = vmatprep.subr.mxu0 0.0
    %160 = vmatpush1.msra.mxu0 %v125
    %161 = vmatprep.subr.mxu0 0.0
    %162 = vmatpush1.msra.mxu0 %v126
    %163 = vmatprep.subr.mxu0 0.0
    %164 = vmatpush1.msra.mxu0 %v127
    %165 = vmatprep.subr.mxu0 0.0
    %166 = vmatpush1.msra.mxu0 %v128
    %167 = vmatprep.subr.mxu0 0.0
    %168 = vmatpush1.msra.mxu0 %v129
    %169 = vmatprep.subr.mxu0 0.0
    %170 = vmatpush1.msra.mxu0 0.0
    %171 = vmatprep.subr.mxu0 0.0
    %172 = vmatpush1.msra.mxu0 0.0
    %173 = vmatprep.subr.mxu0 0.0
    %174 = vmatpush1.msra.mxu0 0.0
    %175 = vmatprep.subr.mxu0 0.0
    %176 = vmatpush1.msra.mxu0 0.0
    %177 = vmatprep.subr.mxu0 0.0
    %178 = vmatpush1.msra.mxu0 0.0
    %179 = vmatprep.subr.mxu0 0.0
    %180 = vmatpush1.msra.mxu0 0.0
    %181 = vmatprep.subr.mxu0 0.0
    %182 = vmatpush1.msra.mxu0 0.0
    %183 = vmatprep.subr.mxu0 0.0
    %184 = vmatpush1.msra.mxu0 0.0
    %185 = vmatprep.subr.mxu0 0.0
    %186 = vmatpush1.msra.mxu0 0.0
    %187 = vmatprep.subr.mxu0 0.0
    %188 = vmatpush1.msra.mxu0 0.0
    %189 = vmatprep.subr.mxu0 0.0
    %190 = vmatpush1.msra.mxu0 0.0
    %191 = vmatprep.subr.mxu0 0.0
    %192 = vmatpush1.msra.mxu0 0.0
    %193 = vmatprep.subr.mxu0 0.0
    %194 = vmatpush1.msra.mxu0 0.0
    %195 = vmatprep.subr.mxu0 0.0
    %196 = vmatpush1.msra.mxu0 0.0
    %197 = vmatprep.subr.mxu0 0.0
    %198 = vmatpush1.msra.mxu0 0.0
    %199 = vmatprep.subr.mxu0 0.0
    %200 = vmatpush1.msra.mxu0 0.0
    %201 = vmatprep.mubr.f32.mxu0 0.0
    %202 = vmatmul.mubr.f32.gmra.mrb[0].mxu0 %v113
    %v203 = vpop.f32.mrb[0].mxu0
    %v204 = vadd.f32 %v135, %v203
    %v205 = vpop.f32.mrb[0].mxu0
    %206 = vdwg.mxu0
    %v207 = vmax.f32 %v204, 0.0
    %v208 = vld [vmem:[%s5] sm:$0xff]
    %v209 = vld [vmem:[%s5 + $0x8] sm:$0xff]
    %v210 = vld [vmem:[%s5 + $0x10] sm:$0xff]
    %v211 = vld [vmem:[%s5 + $0x18] sm:$0xff]
    %v212 = vld [vmem:[%s5 + $0x20] sm:$0xff]
    %v213 = vld [vmem:[%s5 + $0x28] sm:$0xff]
    %v214 = vld [vmem:[%s5 + $0x30] sm:$0xff]
    %v215 = vld [vmem:[%s5 + $0x38] sm:$0xff]
    %v216 = vld [vmem:[%s6] sm:$0x1]
    %v218 = vlaneseq
    %v219 = vshrl.u32 %v218, 7
    %v220 = vsub.s32 0, %v219
    %v221 = vrot.slane %v216, %v220
    %vm223 = vcmask 523264
    %v225 = vsel %vm223, %v207, 0
    %227 = vmatprep.subr.mxu0 0.0
    %228 = vmatpush1.msra.mxu0 %v208
    %229 = vmatprep.subr.mxu0 0.0
    %230 = vmatpush1.msra.mxu0 %v209
    %231 = vmatprep.subr.mxu0 0.0
    %232 = vmatpush1.msra.mxu0 %v210
    %233 = vmatprep.subr.mxu0 0.0
    %234 = vmatpush1.msra.mxu0 %v211
    %235 = vmatprep.subr.mxu0 0.0
    %236 = vmatpush1.msra.mxu0 %v212
    %237 = vmatprep.subr.mxu0 0.0
    %238 = vmatpush1.msra.mxu0 %v213
    %239 = vmatprep.subr.mxu0 0.0
    %240 = vmatpush1.msra.mxu0 %v214
    %241 = vmatprep.subr.mxu0 0.0
    %242 = vmatpush1.msra.mxu0 %v215
    %243 = vmatprep.subr.mxu0 0.0
    %244 = vmatpush1.msra.mxu0 0.0
    %245 = vmatprep.subr.mxu0 0.0
    %246 = vmatpush1.msra.mxu0 0.0
    %247 = vmatprep.subr.mxu0 0.0
    %248 = vmatpush1.msra.mxu0 0.0
    %249 = vmatprep.subr.mxu0 0.0
    %250 = vmatpush1.msra.mxu0 0.0
    %251 = vmatprep.subr.mxu0 0.0
    %252 = vmatpush1.msra.mxu0 0.0
    %253 = vmatprep.subr.mxu0 0.0
    %254 = vmatpush1.msra.mxu0 0.0
    %255 = vmatprep.subr.mxu0 0.0
    %256 = vmatpush1.msra.mxu0 0.0
    %257 = vmatprep.subr.mxu0 0.0
    %258 = vmatpush1.msra.mxu0 0.0
    %259 = vmatprep.subr.mxu0 0.0
    %260 = vmatpush1.msra.mxu0 0.0
    %261 = vmatprep.subr.mxu0 0.0
    %262 = vmatpush1.msra.mxu0 0.0
    %263 = vmatprep.subr.mxu0 0.0
    %264 = vmatpush1.msra.mxu0 0.0
    %265 = vmatprep.subr.mxu0 0.0
    %266 = vmatpush1.msra.mxu0 0.0
    %267 = vmatprep.subr.mxu0 0.0
    %268 = vmatpush1.msra.mxu0 0.0
    %269 = vmatprep.subr.mxu0 0.0
    %270 = vmatpush1.msra.mxu0 0.0
    %271 = vmatprep.subr.mxu0 0.0
    %272 = vmatpush1.msra.mxu0 0.0
    %273 = vmatprep.subr.mxu0 0.0
    %274 = vmatpush1.msra.mxu0 0.0
    %275 = vmatprep.subr.mxu0 0.0
    %276 = vmatpush1.msra.mxu0 0.0
    %277 = vmatprep.subr.mxu0 0.0
    %278 = vmatpush1.msra.mxu0 0.0
    %279 = vmatprep.subr.mxu0 0.0
    %280 = vmatpush1.msra.mxu0 0.0
    %281 = vmatprep.subr.mxu0 0.0
    %282 = vmatpush1.msra.mxu0 0.0
    %283 = vmatprep.subr.mxu0 0.0
    %284 = vmatpush1.msra.mxu0 0.0
    %285 = vmatprep.subr.mxu0 0.0
    %286 = vmatpush1.msra.mxu0 0.0
    %287 = vmatprep.subr.mxu0 0.0
    %288 = vmatpush1.msra.mxu0 0.0
    %289 = vmatprep.subr.mxu0 0.0
    %290 = vmatpush1.msra.mxu0 0.0
    %291 = vmatprep.mubr.f32.mxu0 0.0
    %292 = vmatmul.mubr.f32.gmra.mrb[0].mxu0 %v225
    %v293 = vpop.f32.mrb[0].mxu0
    %v294 = vadd.f32 %v221, %v293
    %v295 = vpop.f32.mrb[0].mxu0
    %296 = vdwg.mxu0
    %vm297 = vcmask 130048
    %298 = vst.msk [vmem:[#allocation2] sm:$0xff] %vm297, %v294
    // Predicated region
    $region30: #{enrollment_forward.1} parent=1 // pred_check
      _
    $region31: #{enrollment_forward.1} parent=1 // pred_check_branch
      %300 = sbr.rel (0) target = $region33
    $region32: #{enrollment_forward.1} parent=1 // pred_region
      %s302 = ssub.s32 128, 128
      %303 = vsyncadd [#allocation3], %s302
      %s305 = sshll.u32 [#allocation2], 4
      %s306 = int_to_ptr.vmem [resolvable:$true] %s305
      %308 = dma.vmem_to_hbm [thread:$0]  %s306, 128, %s7, [#allocation3]
    $region33: #{enrollment_forward.1} parent=1 // pred_fallthru
      _
    // Predicated region
    $region34: #{enrollment_forward.1} parent=1 // pred_check
      _
    $region35: #{enrollment_forward.1} parent=1 // pred_check_branch
      %310 = sbr.rel (0) target = $region37
    $region36: #{enrollment_forward.1} parent=1 // pred_region
      %311 = dma.done [#allocation3], 128
    $region37: #{enrollment_forward.1} parent=1 // pred_fallthru
      _
    %312 = vsyncpa [#allocation3], 1

</llo_original>
